<compile_context>
chip_gen: v5e
topology: v5e:2x2
jax: 0.10.0
libtpu: 0.0.40
codegen_flags: <defaults>
</compile_context>

<pallas_src>
import functools

import jax
import jax.numpy as jnp
from jax.experimental import pallas as pl
from jax.experimental.pallas import tpu as pltpu


_LANE = 128
_TILE_M_MAX = 512
_TILE_N_MAX = 768


def _round_up(x, m):
    return (x + m - 1) // m * m


def _cdiv(a, b):
    return (a + b - 1) // b


def _sublane(dtype):
    # (8, 128) min tile for 4-byte dtypes, (16, 128) for bf16, (32, 128) for int8/fp8.
    return max(8, 32 // jnp.dtype(dtype).itemsize)


def _tpu_vmem_and_cores():
    """Per-TensorCore VMEM capacity and a 'chip has 2 TensorCores' hint."""
    vmem = None
    try:
        vmem = int(pltpu.get_tpu_info().vmem_capacity_bytes)
    except Exception:
        pass
    two_core = False
    try:
        kind = jax.devices()[0].device_kind.lower()
        two_core = any(s in kind for s in ("v4", "v5p", "v7", "7x", "tpu7"))
    except Exception:
        pass
    if vmem is not None and vmem <= (64 << 20):   # v7x: 64 MiB per TC
        two_core = True
    if vmem is None:
        vmem = 64 << 20                           # conservative fallback
    return vmem, two_core


def _select_tiles(M, nf, tw_pad, x_it, w_it, o_it, sub, budget, two_core):
    """Static (trace-time) tile selection.  Returns tile_m, m_pad, tile_n, tile_k, k_pad."""
    # --- N tile: largest multiple-of-128 divisor of tw_pad (grid_n == 1 for
    #     typical TimeLLM target windows 96/192/336/720).
    tile_n = tw_pad
    if tile_n > _TILE_N_MAX:
        for t in range(_TILE_N_MAX, _LANE - 1, -_LANE):
            if tw_pad % t == 0:
                tile_n = t
                break
    # --- M tile: a single full-dim block when M <= 512 (no sublane pad needed);
    #     otherwise balanced tiles, preferring an exact divisor so the whole-array
    #     pad copy of x is skipped.
    if M <= _TILE_M_MAX:
        tile_m, m_pad = M, M
    else:
        nt = _cdiv(M, _TILE_M_MAX)
        tile_m = _round_up(_cdiv(M, nt), sub)
        m_pad = _round_up(M, tile_m)
        if m_pad != M:
            for t in range(tile_m - sub, _TILE_M_MAX // 2 - 1, -sub):
                if M % t == 0:
                    tile_m, m_pad = t, M
                    break
    # --- Megacore (v7x): if there is only one (M, N) block, split whichever axis
    #     duplicates the cheaper HBM stream so both TensorCores get work.
    if m_pad == tile_m and tw_pad == tile_n:
        x_col = M * x_it            # x bytes per contraction column
        w_col = tw_pad * w_it       # weight bytes per contraction column
        worthwhile = two_core or (2 * min(x_col, w_col) <= max(x_col, w_col))
        if worthwhile:
            if x_col <= w_col and tw_pad % (2 * _LANE) == 0:
                tile_n = tw_pad // 2          # re-streams x (the cheap one)
            elif w_col < x_col and M >= 2 * sub and M % (2 * sub) == 0:
                tile_m = M // 2               # re-streams w (the cheap one)
    # --- K tile: as large as the VMEM budget allows; prefer grid_K == 1 or an
    #     exact multiple-of-128 divisor so x never needs a per-call K pad.
    fixed = 2 * tile_m * tile_n * o_it + tile_m * tile_n * 4 + 2 * tile_n * 4
    per_k = 2 * (tile_m * x_it + tile_n * w_it)
    max_k = max(_LANE, (budget - fixed) // per_k)
    if nf <= max_k:
        tile_k, k_pad = nf, nf                 # full-K, no pad, no K grid
    else:
        max_k = (max_k // _LANE) * _LANE
        nf128 = _round_up(nf, _LANE)
        tile_k = _LANE
        for t in range(max_k, _LANE - 1, -_LANE):
            if nf128 % t == 0:                 # largest aligned divisor that fits
                tile_k = t
                break
        k_pad = nf128
        if tile_k < min(512, max_k):           # awkward factorization: pad nf once
            tile_k = min(max_k, 2048)
            k_pad = _round_up(nf, tile_k)
    return tile_m, m_pad, tile_n, tile_k, k_pad


def _flatten_head_kernel(x_ref, w_ref, b_ref, o_ref, *acc):
    # x_ref: (tile_m, tile_k)   w_ref: (tile_k, tile_n)   b_ref: (1, tile_n) f32
    # o_ref: (tile_m, tile_n)   optional acc: (tile_m, tile_n) f32 scratch
    acc_ref = acc[0] if acc else o_ref          # f32 outputs accumulate in place
    k = pl.program_id(2)

    @pl.when(k == 0)
    def _init():
        acc_ref[...] = jnp.zeros_like(acc_ref)

    acc_ref[...] += jnp.dot(x_ref[...], w_ref[...],
                            preferred_element_type=jnp.float32)

    @pl.when(k == pl.num_programs(2) - 1)
    def _finish():
        o_ref[...] = (acc_ref[...] + b_ref[...]).astype(o_ref.dtype)


def prepare_flatten_head_params(weight, bias, param_dtype=None):
    """One-time parameter prep (amortized across calls).

    weight (target_window, nf) -> transposed + lane-padded (nf, tw_pad);
    bias   (target_window,)    -> (1, tw_pad) float32.
    Pass param_dtype=jnp.bfloat16 to halve streamed weight bytes (kernel
    accumulation stays in float32).
    """
    tw, nf = weight.shape
    tw_pad = _round_up(tw, _LANE)
    wdt = jnp.dtype(param_dtype) if param_dtype is not None else weight.dtype
    w_t = jnp.zeros((nf, tw_pad), wdt).at[:, :tw].set(weight.T.astype(wdt))
    b_pad = jnp.zeros((1, tw_pad), jnp.float32).at[0, :tw].set(
        bias.astype(jnp.float32))
    return w_t, b_pad


@functools.partial(jax.jit, static_argnames=("target_window",))
def flatten_head_forward(x, w_t, b_pad, *, target_window):
    """x: [B, n_vars, d_model, patch_num] -> [B, n_vars, target_window]."""
    B, n_vars, d_model, patch_num = x.shape
    nf, tw_pad = w_t.shape
    tw = target_window
    assert nf == d_model * patch_num and tw <= tw_pad

    M = B * n_vars
    x2d = x.reshape(M, nf)                       # contiguous reshape: free

    x_it = jnp.dtype(x.dtype).itemsize
    w_it = jnp.dtype(w_t.dtype).itemsize
    o_it = x_it
    sub = _sublane(x.dtype)

    vmem_cap, two_core = _tpu_vmem_and_cores()
    budget = min(vmem_cap // 2, 56 << 20)        # ~32 MiB on v7x, ~56 MiB on v5e/v6e
    tile_m, m_pad, tile_n, tile_k, k_pad = _select_tiles(
        M, nf, tw_pad, x_it, w_it, o_it, sub, budget, two_core)

    # Pad x only when genuinely needed (common TimeLLM shapes: no pad at all).
    if (m_pad, k_pad) != (M, nf):
        x2d = jnp.pad(x2d, ((0, m_pad - M), (0, k_pad - nf)))
    w_use = w_t if k_pad == nf else jnp.pad(w_t, ((0, k_pad - nf), (0, 0)))

    grid_m = m_pad // tile_m
    grid_n = tw_pad // tile_n
    grid_k = k_pad // tile_k

    use_scratch = jnp.dtype(x.dtype) != jnp.dtype(jnp.float32)
    scratch = ((pltpu.VMEM((tile_m, tile_n), jnp.float32),)
               if use_scratch else ())

    # Triple-buffer streamed operands only if K tiles ended up small.
    pipe = ({"pipeline_mode": pl.Buffered(3)}
            if (grid_k > 1 and tile_k <= 256) else {})

    footprint = (2 * tile_m * tile_k * x_it + 2 * tile_k * tile_n * w_it
                 + 2 * tile_m * tile_n * o_it + 2 * tile_n * 4
                 + (tile_m * tile_n * 4 if use_scratch else 0))
    vmem_limit = int(min(vmem_cap * 3 // 4,
                         max(32 << 20, footprint + (8 << 20))))

    cost = pl.CostEstimate(
        flops=2 * M * nf * tw,
        transcendentals=0,
        bytes_accessed=int(grid_n * m_pad * k_pad * x_it        # x, re-read per N tile
                           + grid_m * k_pad * tw_pad * w_it     # w, re-read per M tile
                           + m_pad * tw_pad * o_it
                           + tw_pad * 4),
    )

    out2d = pl.pallas_call(
        _flatten_head_kernel,
        out_shape=jax.ShapeDtypeStruct((m_pad, tw_pad), x.dtype),
        grid_spec=pltpu.PrefetchScalarGridSpec(
            num_scalar_prefetch=0,
            grid=(grid_m, grid_n, grid_k),
            in_specs=[
                pl.BlockSpec((tile_m, tile_k), lambda i, n, k: (i, k), **pipe),
                pl.BlockSpec((tile_k, tile_n), lambda i, n, k: (k, n), **pipe),
                pl.BlockSpec((1, tile_n), lambda i, n, k: (0, n)),
            ],
            out_specs=pl.BlockSpec((tile_m, tile_n), lambda i, n, k: (i, n)),
            scratch_shapes=scratch,
        ),
        compiler_params=pltpu.CompilerParams(
            dimension_semantics=("parallel", "parallel", "arbitrary"),
            vmem_limit_bytes=vmem_limit,
        ),
        cost_estimate=cost,
    )(x2d, w_use, b_pad)

    # TODO(synk): dropout omitted (head_dropout=0 default / eval-mode identity).
    return out2d[:M, :tw].reshape(B, n_vars, tw)


def reference_forward(x, weight, bias):
    B, n_vars, d_model, patch_num = x.shape
    x2 = x.reshape(B, n_vars, d_model * patch_num)
    return jnp.einsum("bvn,tn->bvt", x2, weight) + bias


if __name__ == "__main__":
    # Small shapes consistent with FlattenHead:
    #   B=2, n_vars=4, d_model=16, patch_num=8 -> nf=128, target_window=32.
    B, n_vars, d_model, patch_num = 2, 4, 16, 8
    nf = d_model * patch_num
    target_window = 32

    key = jax.random.PRNGKey(0)
    kx, kw, kb = jax.random.split(key, 3)

    x = jax.random.normal(kx, (B, n_vars, d_model, patch_num), dtype=jnp.float32)
    # Deterministic nn.Linear-like init (uniform in +-1/sqrt(nf)).
    bound = 1.0 / float(nf) ** 0.5
    weight = jax.random.uniform(kw, (target_window, nf), jnp.float32, -bound, bound)
    bias = jax.random.uniform(kb, (target_window,), jnp.float32, -bound, bound)

    # One-time parameter prep (transpose + lane padding; no per-call transpose).
    w_t, b_pad = prepare_flatten_head_params(weight, bias)

    out = flatten_head_forward(x, w_t, b_pad, target_window=target_window)
    out = jax.block_until_ready(out)

    ref = reference_forward(x, weight, bias)
    assert out.shape == (B, n_vars, target_window)
    assert jnp.allclose(out, ref, atol=1e-4, rtol=1e-4)
    print("KERNEL_OK")
</pallas_src>

<mosaic_0001>
module attributes {stable_mosaic.version = 11 : i64} {
  func.func @_flatten_head_kernel(%arg0: i32, %arg1: i32, %arg2: i32, %arg3: memref<8x128xf32, #tpu.memory_space<vmem>>, %arg4: memref<128x128xf32, #tpu.memory_space<vmem>>, %arg5: memref<1x128xf32, #tpu.memory_space<vmem>>, %arg6: memref<8x128xf32, #tpu.memory_space<vmem>>) attributes {dimension_semantics = [#tpu.dimension_semantics<parallel>, #tpu.dimension_semantics<parallel>, #tpu.dimension_semantics<arbitrary>], iteration_bounds = array<i64: 1, 1, 1>, scalar_prefetch = 0 : i64, scratch_operands = 0 : i64, tpu.core_type = #tpu.core_type<tc>, window_params = [{transform_indices = @transform_0, window_bounds = array<i64: 8, 128>}, {transform_indices = @transform_1, window_bounds = array<i64: 128, 128>}, {transform_indices = @transform_2, window_bounds = array<i64: 1, 128>}, {transform_indices = @transform_3, window_bounds = array<i64: 8, 128>}]} {
    %c0_i32 = arith.constant 0 : i32
    %0 = arith.cmpi eq, %arg2, %c0_i32 : i32
    %1 = arith.extui %0 : i1 to i32
    %c0_i32_0 = arith.constant 0 : i32
    %2 = arith.cmpi ne, %1, %c0_i32_0 : i32
    scf.if %2 {
      %cst_10 = arith.constant 0.000000e+00 : f32
      %12 = vector.broadcast %cst_10 : f32 to vector<8x128xf32>
      %c0_11 = arith.constant 0 : index
      %c0_12 = arith.constant 0 : index
      %13 = vector.load %arg6[%c0_11, %c0_12] : memref<8x128xf32, #tpu.memory_space<vmem>>, vector<8x128xf32>
      tpu.vector_store %arg6[%c0_11, %c0_12], %12 {strides = array<i32>} : memref<8x128xf32, #tpu.memory_space<vmem>>, vector<8x128xf32>,
    } else {
    }
    %c0 = arith.constant 0 : index
    %c0_1 = arith.constant 0 : index
    %3 = vector.load %arg6[%c0, %c0_1] : memref<8x128xf32, #tpu.memory_space<vmem>>, vector<8x128xf32>
    %c0_2 = arith.constant 0 : index
    %c0_3 = arith.constant 0 : index
    %4 = vector.load %arg3[%c0_2, %c0_3] : memref<8x128xf32, #tpu.memory_space<vmem>>, vector<8x128xf32>
    %c0_4 = arith.constant 0 : index
    %c0_5 = arith.constant 0 : index
    %5 = vector.load %arg4[%c0_4, %c0_5] : memref<128x128xf32, #tpu.memory_space<vmem>>, vector<128x128xf32>
    %cst = arith.constant dense<0.000000e+00> : vector<8x128xf32>
    %6 = tpu.matmul %4, %5, %cst {dimension_numbers = #tpu.dot_dimension_numbers<[1], [0], [0], [1], [0, 0, 1, 1], [], []>} : vector<8x128xf32>, vector<128x128xf32>, vector<8x128xf32> -> vector<8x128xf32>
    %7 = arith.addf %3, %6 : vector<8x128xf32>
    %c0_6 = arith.constant 0 : index
    %c0_7 = arith.constant 0 : index
    %8 = vector.load %arg6[%c0_6, %c0_7] : memref<8x128xf32, #tpu.memory_space<vmem>>, vector<8x128xf32>
    tpu.vector_store %arg6[%c0_6, %c0_7], %7 {strides = array<i32>} : memref<8x128xf32, #tpu.memory_space<vmem>>, vector<8x128xf32>,
    %c0_i32_8 = arith.constant 0 : i32
    %9 = arith.cmpi eq, %arg2, %c0_i32_8 : i32
    %10 = arith.extui %9 : i1 to i32
    %c0_i32_9 = arith.constant 0 : i32
    %11 = arith.cmpi ne, %10, %c0_i32_9 : i32
    scf.if %11 {
      %c0_10 = arith.constant 0 : index
      %c0_11 = arith.constant 0 : index
      %12 = vector.load %arg6[%c0_10, %c0_11] : memref<8x128xf32, #tpu.memory_space<vmem>>, vector<8x128xf32>
      %c0_12 = arith.constant 0 : index
      %c0_13 = arith.constant 0 : index
      %13 = vector.load %arg5[%c0_12, %c0_13] : memref<1x128xf32, #tpu.memory_space<vmem>>, vector<1x128xf32>
      %14 = vector.broadcast %13 : vector<1x128xf32> to vector<8x128xf32>
      %15 = arith.addf %12, %14 : vector<8x128xf32>
      %c0_14 = arith.constant 0 : index
      %c0_15 = arith.constant 0 : index
      %16 = vector.load %arg6[%c0_14, %c0_15] : memref<8x128xf32, #tpu.memory_space<vmem>>, vector<8x128xf32>
      tpu.vector_store %arg6[%c0_14, %c0_15], %15 {strides = array<i32>} : memref<8x128xf32, #tpu.memory_space<vmem>>, vector<8x128xf32>,
    } else {
    }
    return
  }
  func.func @transform_0(%arg0: i32, %arg1: i32, %arg2: i32) -> (i32, i32) {
    %c0_i32 = arith.constant 0 : i32
    return %arg0, %arg2 : i32, i32
  }
  func.func @transform_1(%arg0: i32, %arg1: i32, %arg2: i32) -> (i32, i32) {
    %c0_i32 = arith.constant 0 : i32
    return %arg2, %arg1 : i32, i32
  }
  func.func @transform_2(%arg0: i32, %arg1: i32, %arg2: i32) -> (i32, i32) {
    %c0_i32 = arith.constant 0 : i32
    %c0_i32_0 = arith.constant 0 : i32
    return %c0_i32, %arg1 : i32, i32
  }
  func.func @transform_3(%arg0: i32, %arg1: i32, %arg2: i32) -> (i32, i32) {
    %c0_i32 = arith.constant 0 : i32
    return %arg0, %arg1 : i32, i32
  }
}

</mosaic_0001>

<llo_original>
// kernel: flatten_head_forward.1
$region0: #{flatten_head_forward.1}
  #allocation0 [shape = 'u32[]', space=smem, size = 0x4, offset = 0x4, fixed_abs, tag = 'smem constant byte address 0x4 - core index']
  #allocation1 [shape = 'u32[72,128]{1,0:T(1,128)}', space=vmem, size = 0x9000, scoped, tag = 'internal scratch']
  %s0 = inlined_call_operand.vmem [shape: f32[8,128], index: 0, kind: input, shape index: {}]
  %s1 = inlined_call_operand.vmem [shape: f32[128,128], index: 1, kind: input, shape index: {}]
  %s2 = inlined_call_operand.vmem [shape: f32[1,128], index: 2, kind: input, shape index: {}]
  %s3 = inlined_call_operand.hbm [shape: f32[8,128], index: 3, kind: output, shape index: {}]
  %s4 = sld [smem:[#allocation0]]
  $region30: #{flatten_head_forward.1} parent=0
    _
  %s6 = ssub.s32 1, %s4
  %s7 = scalar_select 0, %s6, %s4
  $region1: #{flatten_head_forward.1} parent=0
    #allocation2 [shape = 'u8[4096]{0}', space=vmem, size = 0x1000, scoped, tag = 'output window, operand 0, single buffered']
    #allocation3 [shape = 's32[1]{0}', space=sflag, size = 0x4, scoped, tag = 'scoped memory for flatten_head_forward.1']
    %8 = vsyncpa [#allocation3], 0
    // Predicated region
    $region2: #{flatten_head_forward.1} parent=1 // pred_check
      _
    $region3: #{flatten_head_forward.1} parent=1 // pred_check_branch
      %10 = sbr.rel (0) target = $region5
    $region4: #{flatten_head_forward.1} parent=1 // pred_region
      _
    $region5: #{flatten_head_forward.1} parent=1 // pred_fallthru
      _
    // Predicated region
    $region6: #{flatten_head_forward.1} parent=1 // pred_check
      _
    $region7: #{flatten_head_forward.1} parent=1 // pred_check_branch
      %12 = sbr.rel (0) target = $region9
    $region8: #{flatten_head_forward.1} parent=1 // pred_region
      _
    $region9: #{flatten_head_forward.1} parent=1 // pred_fallthru
      _
    // Predicated region
    $region10: #{flatten_head_forward.1} parent=1 // pred_check
      _
    $region11: #{flatten_head_forward.1} parent=1 // pred_check_branch
      %14 = sbr.rel (0) target = $region13
    $region12: #{flatten_head_forward.1} parent=1 // pred_region
      _
    $region13: #{flatten_head_forward.1} parent=1 // pred_fallthru
      _
    %p15 = scmp.eq.s32.totalorder 0, 0
    // Predicated region
    $region14: #{flatten_head_forward.1} parent=1 // pred_check
      %p16 = pneg %p15
    $region15: #{flatten_head_forward.1} parent=1 // pred_check_branch
      %18 = sbr.rel (%p16) target = $region17
    $region16: #{flatten_head_forward.1} parent=1 // pred_region
      %19 = vst [vmem:[#allocation2] sm:$0xff] 0.0
    $region17: #{flatten_head_forward.1} parent=1 // pred_fallthru
      _
    %v20 = vld [vmem:[#allocation2] sm:$0xff]
    %v21 = vld [vmem:[%s0] sm:$0xff]
    %v22 = vld [vmem:[%s1] sm:$0xff]
    %v23 = vld [vmem:[%s1 + $0x8] sm:$0xff]
    %v24 = vld [vmem:[%s1 + $0x10] sm:$0xff]
    %v25 = vld [vmem:[%s1 + $0x18] sm:$0xff]
    %v26 = vld [vmem:[%s1 + $0x20] sm:$0xff]
    %v27 = vld [vmem:[%s1 + $0x28] sm:$0xff]
    %v28 = vld [vmem:[%s1 + $0x30] sm:$0xff]
    %v29 = vld [vmem:[%s1 + $0x38] sm:$0xff]
    %v30 = vld [vmem:[%s1 + $0x40] sm:$0xff]
    %v31 = vld [vmem:[%s1 + $0x48] sm:$0xff]
    %v32 = vld [vmem:[%s1 + $0x50] sm:$0xff]
    %v33 = vld [vmem:[%s1 + $0x58] sm:$0xff]
    %v34 = vld [vmem:[%s1 + $0x60] sm:$0xff]
    %v35 = vld [vmem:[%s1 + $0x68] sm:$0xff]
    %v36 = vld [vmem:[%s1 + $0x70] sm:$0xff]
    %v37 = vld [vmem:[%s1 + $0x78] sm:$0xff]
    %38 = vmatpush.msra.mxu0 %v37
    %39 = vmatpush.msra.mxu0 %v36
    %40 = vmatpush.msra.mxu0 %v35
    %41 = vmatpush.msra.mxu0 %v34
    %42 = vmatpush.msra.mxu0 %v33
    %43 = vmatpush.msra.mxu0 %v32
    %44 = vmatpush.msra.mxu0 %v31
    %45 = vmatpush.msra.mxu0 %v30
    %46 = vmatpush.msra.mxu0 %v29
    %47 = vmatpush.msra.mxu0 %v28
    %48 = vmatpush.msra.mxu0 %v27
    %49 = vmatpush.msra.mxu0 %v26
    %50 = vmatpush.msra.mxu0 %v25
    %51 = vmatpush.msra.mxu0 %v24
    %52 = vmatpush.msra.mxu0 %v23
    %53 = vmatpush.msra.mxu0 %v22
    %54 = vmatmul.f32.gmra.mxu0 %v21
    %v55 = vpop.f32.mrf.mxu0
    %v56 = vadd.f32 0.0, %v55
    %57 = vdwg.mxu0
    %v58 = vadd.f32 %v20, %v56
    %59 = vst [vmem:[#allocation2] sm:$0xff] %v58
    // Predicated region
    $region18: #{flatten_head_forward.1} parent=1 // pred_check
      %p60 = pneg %p15
    $region19: #{flatten_head_forward.1} parent=1 // pred_check_branch
      %62 = sbr.rel (%p60) target = $region21
    $region20: #{flatten_head_forward.1} parent=1 // pred_region
      %v63 = vld [vmem:[#allocation2] sm:$0xff]
      %v64 = vld [vmem:[%s2] sm:$0x1]
      %v66 = vperm.slane %v64, 0
      %v68 = vadd.f32 %v63, %v66
      %69 = vst [vmem:[#allocation2] sm:$0xff] %v68
    $region21: #{flatten_head_forward.1} parent=1 // pred_fallthru
      _
    // Predicated region
    $region22: #{flatten_head_forward.1} parent=1 // pred_check
      _
    $region23: #{flatten_head_forward.1} parent=1 // pred_check_branch
      %71 = sbr.rel (0) target = $region25
    $region24: #{flatten_head_forward.1} parent=1 // pred_region
      %73 = vsyncadd [#allocation3], 0
      %s75 = sshll.u32 [#allocation2], 4
      %s76 = int_to_ptr.vmem [resolvable:$true] %s75
      %s77 = sshll.u32 %s3, 4
      %s78 = int_to_ptr.hbm [resolvable:$true] %s77
      %80 = dma.vmem_to_hbm [thread:$0]  %s76, 128, %s78, [#allocation3]
    $region25: #{flatten_head_forward.1} parent=1 // pred_fallthru
      _
    // Predicated region
    $region26: #{flatten_head_forward.1} parent=1 // pred_check
      _
    $region27: #{flatten_head_forward.1} parent=1 // pred_check_branch
      %82 = sbr.rel (0) target = $region29
    $region28: #{flatten_head_forward.1} parent=1 // pred_region
      %84 = dma.done [#allocation3], 128
    $region29: #{flatten_head_forward.1} parent=1 // pred_fallthru
      _
    %85 = vsyncpa [#allocation3], 1

</llo_original>
